<compile_context>
chip_gen: v7x
topology: tpu7x:2x2x1
jax: 0.10.0
libtpu: 0.0.40
codegen_flags: <defaults>
</compile_context>

<pallas_src>
import jax
import jax.numpy as jnp
from jax.experimental import pallas as pl
from jax.experimental.pallas import tpu as pltpu


_TILE_B_MAX = 2048          # rows of x/out per grid step (payload is tiny; amortize per-step cost)
_BF16_MATMUL_MIN_DIM = 512  # switch dot operands to bf16 once a matmul dim reaches this
_PACKED_DUAL_MAX_2H = 256   # use block-diagonal online||target fusion while 2*hidden <= this


# ---------------------------------------------------------------------------
# In-kernel math
# ---------------------------------------------------------------------------
def _matmul(x, w):
    """MXU matmul with f32 accumulation; bf16 operands once dims are MXU-bound."""
    if w.shape[0] >= _BF16_MATMUL_MIN_DIM or w.shape[1] >= _BF16_MATMUL_MIN_DIM:
        x = x.astype(jnp.bfloat16)
        w = w.astype(jnp.bfloat16)
    return jnp.dot(x, w, preferred_element_type=jnp.float32)


def _linear_relu(x, w, b):
    return jnp.maximum(_matmul(x, w) + b, 0.0)


def _softmax(h):
    # Exact division so every row sums to 1 within f32 rounding.
    m = jnp.max(h, axis=-1, keepdims=True)
    e = jnp.exp(h - m)
    return e / jnp.sum(e, axis=-1, keepdims=True)


def _mlp_softmax(x, w1, b1, w2, b2, w3, b3):
    h = _linear_relu(x, w1, b1)
    h = _linear_relu(h, w2, b2)
    h = _linear_relu(h, w3, b3)
    return _softmax(h)


# ---------------------------------------------------------------------------
# Kernels
# ---------------------------------------------------------------------------
def _dqn_single_kernel(x_ref, w1, b1, w2, b2, w3, b3, o_ref):
    o_ref[...] = _mlp_softmax(
        x_ref[...], w1[...], b1[...], w2[...], b2[...], w3[...], b3[...]
    ).astype(o_ref.dtype)


def _dqn_dual_packed_kernel(x_ref, w1, b1, w2, b2, w3, b3, o_on_ref, o_tg_ref):
    """Fused online+target via packed weights: 3 matmuls instead of 6."""
    h = _linear_relu(x_ref[...], w1[...], b1[...])   # (tile, 2h)
    h = _linear_relu(h, w2[...], b2[...])            # (tile, 2h)
    h = _linear_relu(h, w3[...], b3[...])            # (tile, 2*out)
    n_out = o_on_ref.shape[-1]
    o_on_ref[...] = _softmax(h[:, :n_out]).astype(o_on_ref.dtype)
    o_tg_ref[...] = _softmax(h[:, n_out:]).astype(o_tg_ref.dtype)


def _dqn_dual_kernel(x_ref,
                     ow1, ob1, ow2, ob2, ow3, ob3,
                     tw1, tb1, tw2, tb2, tw3, tb3,
                     o_on_ref, o_tg_ref):
    """Fused online+target for large hidden (x DMA'd once, two outputs)."""
    x = x_ref[...]
    o_on_ref[...] = _mlp_softmax(
        x, ow1[...], ob1[...], ow2[...], ob2[...], ow3[...], ob3[...]
    ).astype(o_on_ref.dtype)
    o_tg_ref[...] = _mlp_softmax(
        x, tw1[...], tb1[...], tw2[...], tb2[...], tw3[...], tb3[...]
    ).astype(o_tg_ref.dtype)


# ---------------------------------------------------------------------------
# Tiling / specs / compiler params
# ---------------------------------------------------------------------------
def _batch_tile(batch):
    """Rows per grid step.

    batch < 16 -> single block covering the batch (block == full dim is legal
    for any size). batch >= 16 -> at least two grid steps so the 'parallel'
    batch axis can shard across v7x's two TensorCores; tile is a multiple of 8
    (sublane constraint) and capped so per-step payload stays tiny vs VMEM.
    """
    if batch < 16:
        return batch
    half = -(-batch // 2)                    # cdiv(batch, 2)
    return min(_TILE_B_MAX, ((half + 7) // 8) * 8)


def _row_spec(tile, feat):
    # Activation tile: marches down the batch axis with the grid.
    return pl.BlockSpec((tile, feat), lambda i: (i, 0))


def _resident_spec(shape):
    # Constant index_map -> block index never changes -> weights/biases are
    # DMA'd once and stay resident in VMEM for the whole batch grid.
    return pl.BlockSpec(shape, lambda i: (0,) * len(shape))


def _maybe_vmem_limit(params, tile, in_dim, act_widths):
    """Explicit scoped-VMEM limit only when the compiler default gets tight.

    Budget: resident params x2 (pipeline allocation) + double-buffered x/out
    tiles + activation tiles. At toy dims this returns None (compiler default).
    """
    param_bytes = sum(int(p.size) * p.dtype.itemsize for p in params)
    act_bytes = tile * (in_dim + sum(act_widths)) * 4
    needed = 2 * param_bytes + 2 * act_bytes
    if needed <= 28 * 1024 * 1024:
        return None
    try:
        physical = pltpu.get_tpu_info().vmem_capacity_bytes
    except Exception:  # e.g. interpret mode on a CPU host
        physical = 64 * 1024 * 1024  # v7x is the smallest per-TC VMEM
    return int(min(needed + (4 << 20), physical - (8 << 20)))


def _compiler_params(vmem_limit):
    if vmem_limit is None:
        return pltpu.CompilerParams(dimension_semantics=("parallel",))
    return pltpu.CompilerParams(dimension_semantics=("parallel",),
                                vmem_limit_bytes=vmem_limit)


# ---------------------------------------------------------------------------
# Wrappers
# ---------------------------------------------------------------------------
@jax.jit
def _dqn_forward_single(x, params):
    w1, b1, w2, b2, w3, b3 = params
    batch, in_dim = x.shape
    hidden, out_dim = w1.shape[1], w3.shape[1]
    tile = _batch_tile(batch)
    vmem_limit = _maybe_vmem_limit(params, tile, in_dim, (hidden, hidden, out_dim))
    return pl.pallas_call(
        _dqn_single_kernel,
        out_shape=jax.ShapeDtypeStruct((batch, out_dim), jnp.float32),
        grid=(pl.cdiv(batch, tile),),
        in_specs=[_row_spec(tile, in_dim)]
        + [_resident_spec(p.shape) for p in params],
        out_specs=_row_spec(tile, out_dim),
        compiler_params=_compiler_params(vmem_limit),
    )(x, *params)


@jax.jit
def _dqn_forward_dual_packed(x, packed):
    w1, b1, w2, b2, w3, b3 = packed
    batch, in_dim = x.shape
    out_dim = w3.shape[1] // 2
    tile = _batch_tile(batch)
    vmem_limit = _maybe_vmem_limit(
        packed, tile, in_dim, (w1.shape[1], w2.shape[1], w3.shape[1]))
    out_on, out_tg = pl.pallas_call(
        _dqn_dual_packed_kernel,
        out_shape=(jax.ShapeDtypeStruct((batch, out_dim), jnp.float32),
                   jax.ShapeDtypeStruct((batch, out_dim), jnp.float32)),
        grid=(pl.cdiv(batch, tile),),
        in_specs=[_row_spec(tile, in_dim)]
        + [_resident_spec(p.shape) for p in packed],
        out_specs=(_row_spec(tile, out_dim), _row_spec(tile, out_dim)),
        compiler_params=_compiler_params(vmem_limit),
    )(x, *packed)
    return out_on, out_tg


@jax.jit
def _dqn_forward_dual(x, online, target):
    batch, in_dim = x.shape
    hidden, out_dim = online[0].shape[1], online[4].shape[1]
    tile = _batch_tile(batch)
    all_params = tuple(online) + tuple(target)
    vmem_limit = _maybe_vmem_limit(all_params, tile, in_dim,
                                   (hidden, hidden, out_dim) * 2)
    out_on, out_tg = pl.pallas_call(
        _dqn_dual_kernel,
        out_shape=(jax.ShapeDtypeStruct((batch, out_dim), jnp.float32),
                   jax.ShapeDtypeStruct((batch, out_dim), jnp.float32)),
        grid=(pl.cdiv(batch, tile),),
        in_specs=[_row_spec(tile, in_dim)]
        + [_resident_spec(p.shape) for p in all_params],
        out_specs=(_row_spec(tile, out_dim), _row_spec(tile, out_dim)),
        compiler_params=_compiler_params(vmem_limit),
    )(x, *all_params)
    return out_on, out_tg


# ---------------------------------------------------------------------------
# Parameter init / packing / module-like wrapper
# ---------------------------------------------------------------------------
def init_linear_params(key, in_dim, out_dim):
    """Deterministic init, PyTorch nn.Linear style: U(-1/sqrt(in), 1/sqrt(in))."""
    kw, kb = jax.random.split(key)
    bound = 1.0 / jnp.sqrt(jnp.float32(in_dim))
    # Stored as (in_dim, out_dim) == W_pytorch.T
    w = jax.random.uniform(kw, (in_dim, out_dim), jnp.float32, -bound, bound)
    b = jax.random.uniform(kb, (1, out_dim), jnp.float32, -bound, bound)
    return w, b


def _block_diag(a, b):
    z_ab = jnp.zeros((a.shape[0], b.shape[1]), a.dtype)
    z_ba = jnp.zeros((b.shape[0], a.shape[1]), a.dtype)
    top = jnp.concatenate([a, z_ab], axis=1)
    bot = jnp.concatenate([z_ba, b], axis=1)
    return jnp.concatenate([top, bot], axis=0)


def _pack_dual_params(online, target):
    ow1, ob1, ow2, ob2, ow3, ob3 = online
    tw1, tb1, tw2, tb2, tw3, tb3 = target
    w1 = jnp.concatenate([ow1, tw1], axis=1)      # (in, 2h)
    b1 = jnp.concatenate([ob1, tb1], axis=1)      # (1, 2h)
    w2 = _block_diag(ow2, tw2)                    # (2h, 2h)
    b2 = jnp.concatenate([ob2, tb2], axis=1)      # (1, 2h)
    w3 = _block_diag(ow3, tw3)                    # (2h, 2*out)
    b3 = jnp.concatenate([ob3, tb3], axis=1)      # (1, 2*out)
    return (w1, b1, w2, b2, w3, b3)


class DQNNetPallas:
    def __init__(self, input_dim, hidden_dim, output_dim, key):
        k1, k2, k3 = jax.random.split(key, 3)
        w1, b1 = init_linear_params(k1, input_dim, hidden_dim)
        w2, b2 = init_linear_params(k2, hidden_dim, hidden_dim)
        w3, b3 = init_linear_params(k3, hidden_dim, output_dim)
        online = (w1, b1, w2, b2, w3, b3)
        # target = copy.deepcopy(online): identical values, frozen.
        target = tuple(jnp.array(p) for p in online)
        self.params = {"online": online, "target": target}
        self.output_dim = output_dim
        # Block-diagonal online||target packing is a win only while 2*hidden
        # fits the MXU tile budget (latency-bound small-dim regime).
        self._use_packed_dual = (2 * hidden_dim) <= _PACKED_DUAL_MAX_2H
        self._packed = (_pack_dual_params(online, target)
                        if self._use_packed_dual else None)

    def __call__(self, x, mode):
        if mode not in ("online", "target"):
            raise ValueError("mode error")
        return _dqn_forward_single(x, self.params[mode])

    def forward_both(self, x):
        """Fused online+target forward (one pallas_call, one launch)."""
        if self._use_packed_dual:
            return _dqn_forward_dual_packed(x, self._packed)
        return _dqn_forward_dual(x, self.params["online"], self.params["target"])


def _reference_forward(x, params):
    w1, b1, w2, b2, w3, b3 = params
    hi = jax.lax.Precision.HIGHEST
    h = jnp.maximum(jnp.dot(x, w1, precision=hi) + b1, 0.0)
    h = jnp.maximum(jnp.dot(h, w2, precision=hi) + b2, 0.0)
    h = jnp.maximum(jnp.dot(h, w3, precision=hi) + b3, 0.0)
    return jax.nn.softmax(h, axis=-1)


if __name__ == "__main__":
    key = jax.random.PRNGKey(0)
    k_param, k_x = jax.random.split(key)

    batch, input_dim, hidden_dim, output_dim = 8, 16, 32, 8
    net = DQNNetPallas(input_dim, hidden_dim, output_dim, k_param)

    x = jax.random.normal(k_x, (batch, input_dim), jnp.float32)

    # Fused online+target pass (the common DQN pattern): one kernel launch,
    # packed (block-diagonal) weights -> 3 matmuls total.
    out_online, out_target = net.forward_both(x)
    jax.block_until_ready(out_online)
    jax.block_until_ready(out_target)

    # Single-mode path still available (mirrors DQNNet.forward(x, mode)).
    out_single = net(x, "online")
    jax.block_until_ready(out_single)

    # Sanity checks against a pure-JAX reference of the same math.
    ref = _reference_forward(x, net.params["online"])
    assert out_online.shape == (batch, output_dim)
    assert out_target.shape == (batch, output_dim)
    assert jnp.allclose(out_online, ref, atol=2e-3, rtol=2e-3)
    assert jnp.allclose(out_single, out_online, atol=1e-5)
    assert jnp.allclose(out_online, out_target, atol=1e-6)
    # Exact-division softmax: rows sum to 1 within f32 rounding.
    assert jnp.allclose(jnp.sum(out_online, axis=-1), 1.0, atol=1e-5)
    assert jnp.allclose(jnp.sum(out_single, axis=-1), 1.0, atol=1e-5)

    print("KERNEL_OK")
</pallas_src>

<mosaic_0001>
module attributes {stable_mosaic.version = 11 : i64} {
  func.func @_dqn_dual_packed_kernel(%arg0: i32, %arg1: memref<8x16xf32, #tpu.memory_space<vmem>>, %arg2: memref<16x64xf32, #tpu.memory_space<vmem>>, %arg3: memref<1x64xf32, #tpu.memory_space<vmem>>, %arg4: memref<64x64xf32, #tpu.memory_space<vmem>>, %arg5: memref<1x64xf32, #tpu.memory_space<vmem>>, %arg6: memref<64x16xf32, #tpu.memory_space<vmem>>, %arg7: memref<1x16xf32, #tpu.memory_space<vmem>>, %arg8: memref<8x8xf32, #tpu.memory_space<vmem>>, %arg9: memref<8x8xf32, #tpu.memory_space<vmem>>) attributes {dimension_semantics = [#tpu.dimension_semantics<parallel>], iteration_bounds = array<i64: 1>, scalar_prefetch = 0 : i64, scratch_operands = 0 : i64, tpu.core_type = #tpu.core_type<tc>, window_params = [{transform_indices = @transform_0, window_bounds = array<i64: 8, 16>}, {pipeline_mode = #tpu.pipeline_mode<synchronous>, transform_indices = @transform_1, window_bounds = array<i64: 16, 64>}, {pipeline_mode = #tpu.pipeline_mode<synchronous>, transform_indices = @transform_2, window_bounds = array<i64: 1, 64>}, {pipeline_mode = #tpu.pipeline_mode<synchronous>, transform_indices = @transform_3, window_bounds = array<i64: 64, 64>}, {pipeline_mode = #tpu.pipeline_mode<synchronous>, transform_indices = @transform_4, window_bounds = array<i64: 1, 64>}, {pipeline_mode = #tpu.pipeline_mode<synchronous>, transform_indices = @transform_5, window_bounds = array<i64: 64, 16>}, {pipeline_mode = #tpu.pipeline_mode<synchronous>, transform_indices = @transform_6, window_bounds = array<i64: 1, 16>}, {transform_indices = @transform_7, window_bounds = array<i64: 8, 8>}, {transform_indices = @transform_8, window_bounds = array<i64: 8, 8>}]} {
    %c0 = arith.constant 0 : index
    %c0_0 = arith.constant 0 : index
    %0 = vector.load %arg1[%c0, %c0_0] : memref<8x16xf32, #tpu.memory_space<vmem>>, vector<8x16xf32>
    %c0_1 = arith.constant 0 : index
    %c0_2 = arith.constant 0 : index
    %1 = vector.load %arg2[%c0_1, %c0_2] : memref<16x64xf32, #tpu.memory_space<vmem>>, vector<16x64xf32>
    %c0_3 = arith.constant 0 : index
    %c0_4 = arith.constant 0 : index
    %2 = vector.load %arg3[%c0_3, %c0_4] : memref<1x64xf32, #tpu.memory_space<vmem>>, vector<1x64xf32>
    %cst = arith.constant dense<0.000000e+00> : vector<8x64xf32>
    %3 = tpu.matmul %0, %1, %cst {dimension_numbers = #tpu.dot_dimension_numbers<[1], [0], [0], [1], [0, 0, 1, 1], [], []>} : vector<8x16xf32>, vector<16x64xf32>, vector<8x64xf32> -> vector<8x64xf32>
    %4 = vector.broadcast %2 : vector<1x64xf32> to vector<8x64xf32>
    %5 = arith.addf %3, %4 : vector<8x64xf32>
    %cst_5 = arith.constant 0.000000e+00 : f32
    %6 = vector.broadcast %cst_5 : f32 to vector<8x64xf32>
    %7 = arith.maximumf %5, %6 : vector<8x64xf32>
    %c0_6 = arith.constant 0 : index
    %c0_7 = arith.constant 0 : index
    %8 = vector.load %arg4[%c0_6, %c0_7] : memref<64x64xf32, #tpu.memory_space<vmem>>, vector<64x64xf32>
    %c0_8 = arith.constant 0 : index
    %c0_9 = arith.constant 0 : index
    %9 = vector.load %arg5[%c0_8, %c0_9] : memref<1x64xf32, #tpu.memory_space<vmem>>, vector<1x64xf32>
    %cst_10 = arith.constant dense<0.000000e+00> : vector<8x64xf32>
    %10 = tpu.matmul %7, %8, %cst_10 {dimension_numbers = #tpu.dot_dimension_numbers<[1], [0], [0], [1], [0, 0, 1, 1], [], []>} : vector<8x64xf32>, vector<64x64xf32>, vector<8x64xf32> -> vector<8x64xf32>
    %11 = vector.broadcast %9 : vector<1x64xf32> to vector<8x64xf32>
    %12 = arith.addf %10, %11 : vector<8x64xf32>
    %cst_11 = arith.constant 0.000000e+00 : f32
    %13 = vector.broadcast %cst_11 : f32 to vector<8x64xf32>
    %14 = arith.maximumf %12, %13 : vector<8x64xf32>
    %c0_12 = arith.constant 0 : index
    %c0_13 = arith.constant 0 : index
    %15 = vector.load %arg6[%c0_12, %c0_13] : memref<64x16xf32, #tpu.memory_space<vmem>>, vector<64x16xf32>
    %c0_14 = arith.constant 0 : index
    %c0_15 = arith.constant 0 : index
    %16 = vector.load %arg7[%c0_14, %c0_15] : memref<1x16xf32, #tpu.memory_space<vmem>>, vector<1x16xf32>
    %cst_16 = arith.constant dense<0.000000e+00> : vector<8x16xf32>
    %17 = tpu.matmul %14, %15, %cst_16 {dimension_numbers = #tpu.dot_dimension_numbers<[1], [0], [0], [1], [0, 0, 1, 1], [], []>} : vector<8x64xf32>, vector<64x16xf32>, vector<8x16xf32> -> vector<8x16xf32>
    %18 = vector.broadcast %16 : vector<1x16xf32> to vector<8x16xf32>
    %19 = arith.addf %17, %18 : vector<8x16xf32>
    %cst_17 = arith.constant 0.000000e+00 : f32
    %20 = vector.broadcast %cst_17 : f32 to vector<8x16xf32>
    %21 = arith.maximumf %19, %20 : vector<8x16xf32>
    %22 = vector.extract_strided_slice %21 {offsets = [0, 0], sizes = [8, 8], strides = [1, 1]} : vector<8x16xf32> to vector<8x8xf32>
    %cst_18 = arith.constant dense<0xFF800000> : vector<8xf32>
    %23 = vector.multi_reduction <maximumf>, %22, %cst_18 [1] : vector<8x8xf32> to vector<8xf32>
    %24 = vector.shape_cast %23 : vector<8xf32> to vector<8x1xf32>
    %25 = vector.broadcast %24 : vector<8x1xf32> to vector<8x8xf32>
    %26 = arith.subf %22, %25 : vector<8x8xf32>
    %27 = math.exp %26 : vector<8x8xf32>
    %cst_19 = arith.constant dense<0.000000e+00> : vector<8xf32>
    %28 = vector.multi_reduction <add>, %27, %cst_19 [1] : vector<8x8xf32> to vector<8xf32>
    %29 = vector.shape_cast %28 : vector<8xf32> to vector<8x1xf32>
    %30 = vector.broadcast %29 : vector<8x1xf32> to vector<8x8xf32>
    %31 = arith.divf %27, %30 : vector<8x8xf32>
    %c0_20 = arith.constant 0 : index
    %c0_21 = arith.constant 0 : index
    %32 = vector.load %arg8[%c0_20, %c0_21] : memref<8x8xf32, #tpu.memory_space<vmem>>, vector<8x8xf32>
    tpu.vector_store %arg8[%c0_20, %c0_21], %31 {strides = array<i32>} : memref<8x8xf32, #tpu.memory_space<vmem>>, vector<8x8xf32>,
    %33 = vector.extract_strided_slice %21 {offsets = [0, 8], sizes = [8, 8], strides = [1, 1]} : vector<8x16xf32> to vector<8x8xf32>
    %cst_22 = arith.constant dense<0xFF800000> : vector<8xf32>
    %34 = vector.multi_reduction <maximumf>, %33, %cst_22 [1] : vector<8x8xf32> to vector<8xf32>
    %35 = vector.shape_cast %34 : vector<8xf32> to vector<8x1xf32>
    %36 = vector.broadcast %35 : vector<8x1xf32> to vector<8x8xf32>
    %37 = arith.subf %33, %36 : vector<8x8xf32>
    %38 = math.exp %37 : vector<8x8xf32>
    %cst_23 = arith.constant dense<0.000000e+00> : vector<8xf32>
    %39 = vector.multi_reduction <add>, %38, %cst_23 [1] : vector<8x8xf32> to vector<8xf32>
    %40 = vector.shape_cast %39 : vector<8xf32> to vector<8x1xf32>
    %41 = vector.broadcast %40 : vector<8x1xf32> to vector<8x8xf32>
    %42 = arith.divf %38, %41 : vector<8x8xf32>
    %c0_24 = arith.constant 0 : index
    %c0_25 = arith.constant 0 : index
    %43 = vector.load %arg9[%c0_24, %c0_25] : memref<8x8xf32, #tpu.memory_space<vmem>>, vector<8x8xf32>
    tpu.vector_store %arg9[%c0_24, %c0_25], %42 {strides = array<i32>} : memref<8x8xf32, #tpu.memory_space<vmem>>, vector<8x8xf32>,
    return
  }
  func.func @transform_0(%arg0: i32) -> (i32, i32) {
    %c0_i32 = arith.constant 0 : i32
    %c0_i32_0 = arith.constant 0 : i32
    return %arg0, %c0_i32 : i32, i32
  }
  func.func @transform_1(%arg0: i32) -> (i32, i32) {
    %c0_i32 = arith.constant 0 : i32
    %c0_i32_0 = arith.constant 0 : i32
    %c0_i32_1 = arith.constant 0 : i32
    return %c0_i32, %c0_i32_0 : i32, i32
  }
  func.func @transform_2(%arg0: i32) -> (i32, i32) {
    %c0_i32 = arith.constant 0 : i32
    %c0_i32_0 = arith.constant 0 : i32
    %c0_i32_1 = arith.constant 0 : i32
    return %c0_i32, %c0_i32_0 : i32, i32
  }
  func.func @transform_3(%arg0: i32) -> (i32, i32) {
    %c0_i32 = arith.constant 0 : i32
    %c0_i32_0 = arith.constant 0 : i32
    %c0_i32_1 = arith.constant 0 : i32
    return %c0_i32, %c0_i32_0 : i32, i32
  }
  func.func @transform_4(%arg0: i32) -> (i32, i32) {
    %c0_i32 = arith.constant 0 : i32
    %c0_i32_0 = arith.constant 0 : i32
    %c0_i32_1 = arith.constant 0 : i32
    return %c0_i32, %c0_i32_0 : i32, i32
  }
  func.func @transform_5(%arg0: i32) -> (i32, i32) {
    %c0_i32 = arith.constant 0 : i32
    %c0_i32_0 = arith.constant 0 : i32
    %c0_i32_1 = arith.constant 0 : i32
    return %c0_i32, %c0_i32_0 : i32, i32
  }
  func.func @transform_6(%arg0: i32) -> (i32, i32) {
    %c0_i32 = arith.constant 0 : i32
    %c0_i32_0 = arith.constant 0 : i32
    %c0_i32_1 = arith.constant 0 : i32
    return %c0_i32, %c0_i32_0 : i32, i32
  }
  func.func @transform_7(%arg0: i32) -> (i32, i32) {
    %c0_i32 = arith.constant 0 : i32
    %c0_i32_0 = arith.constant 0 : i32
    return %arg0, %c0_i32 : i32, i32
  }
  func.func @transform_8(%arg0: i32) -> (i32, i32) {
    %c0_i32 = arith.constant 0 : i32
    %c0_i32_0 = arith.constant 0 : i32
    return %arg0, %c0_i32 : i32, i32
  }
}

</mosaic_0001>

<llo_original>
// kernel: _dqn_forward_dual_packed.1
$region0: #{_dqn_forward_dual_packed.1}
  #allocation0 [shape = 'u32[]', space=smem, size = 0x4, offset = 0x4, fixed_abs, tag = 'smem constant byte address 0x4 - core index']
  #allocation1 [shape = 'u32[144,128]{1,0:T(1,128)}', space=vmem, size = 0x12000, scoped, tag = 'internal scratch']
  %s0 = inlined_call_operand.hbm [shape: f32[8,16], index: 0, kind: input, shape index: {}]
  %s1 = inlined_call_operand.vmem [shape: f32[16,64], index: 1, kind: input, shape index: {}]
  %s2 = inlined_call_operand.vmem [shape: f32[1,64], index: 2, kind: input, shape index: {}]
  %s3 = inlined_call_operand.vmem [shape: f32[64,64], index: 3, kind: input, shape index: {}]
  %s4 = inlined_call_operand.vmem [shape: f32[1,64], index: 4, kind: input, shape index: {}]
  %s5 = inlined_call_operand.vmem [shape: f32[64,16], index: 5, kind: input, shape index: {}]
  %s6 = inlined_call_operand.vmem [shape: f32[1,16], index: 6, kind: input, shape index: {}]
  %s7 = inlined_call_operand.hbm [shape: f32[8,8], index: 7, kind: output, shape index: {0}]
  %s8 = inlined_call_operand.hbm [shape: f32[8,8], index: 8, kind: output, shape index: {1}]
  %9 = xla_tuple %s7, %s8
  %s10 = sld [smem:[#allocation0]]
  $region50: #{_dqn_forward_dual_packed.1} parent=0
    _
  %s12 = ssub.s32 1, %s10
  %s13 = scalar_select 0, %s12, %s10
  $region1: #{_dqn_forward_dual_packed.1} parent=0
    #allocation2 [shape = 'u8[4096]{0}', space=vmem, size = 0x1000, scoped, tag = 'input window, operand 0, single buffered']
    #allocation3 [shape = 's32[1]{0}', space=sflag, size = 0x4, scoped, tag = 'scoped memory for _dqn_forward_dual_packed.1']
    #allocation4 [shape = 's32[1]{0}', space=sflag, size = 0x4, scoped, tag = 'scoped memory for _dqn_forward_dual_packed.1']
    #allocation5 [shape = 'u8[4096]{0}', space=vmem, size = 0x1000, scoped, tag = 'output window, operand 0, single buffered']
    #allocation6 [shape = 'u8[4096]{0}', space=vmem, size = 0x1000, scoped, tag = 'output window, operand 1, single buffered']
    #allocation7 [shape = 's32[1]{0}', space=sflag, size = 0x4, scoped, tag = 'scoped memory for _dqn_forward_dual_packed.1']
    %14 = vsyncpa [#allocation3], 0
    %15 = vsyncpa [#allocation4], 0
    %16 = vsyncpa [#allocation7], 0
    // Predicated region
    $region2: #{_dqn_forward_dual_packed.1} parent=1 // pred_check
      _
    $region3: #{_dqn_forward_dual_packed.1} parent=1 // pred_check_branch
      %18 = sbr.rel (0) target = $region5
    $region4: #{_dqn_forward_dual_packed.1} parent=1 // pred_region
      %s20 = ssub.s32 128, 128
      %21 = vsyncadd [#allocation3], %s20
      %s23 = sshll.u32 [#allocation2], 4
      %s24 = int_to_ptr.vmem [resolvable:$true] %s23
      %26 = dma.hbm_to_vmem [thread:$0]  %s0, 128, %s24, [#allocation3]
    $region5: #{_dqn_forward_dual_packed.1} parent=1 // pred_fallthru
      _
    // Predicated region
    $region6: #{_dqn_forward_dual_packed.1} parent=1 // pred_check
      _
    $region7: #{_dqn_forward_dual_packed.1} parent=1 // pred_check_branch
      %28 = sbr.rel (0) target = $region9
    $region8: #{_dqn_forward_dual_packed.1} parent=1 // pred_region
      _
    $region9: #{_dqn_forward_dual_packed.1} parent=1 // pred_fallthru
      _
    // Predicated region
    $region10: #{_dqn_forward_dual_packed.1} parent=1 // pred_check
      _
    $region11: #{_dqn_forward_dual_packed.1} parent=1 // pred_check_branch
      %30 = sbr.rel (0) target = $region13
    $region12: #{_dqn_forward_dual_packed.1} parent=1 // pred_region
      _
    $region13: #{_dqn_forward_dual_packed.1} parent=1 // pred_fallthru
      _
    // Predicated region
    $region14: #{_dqn_forward_dual_packed.1} parent=1 // pred_check
      _
    $region15: #{_dqn_forward_dual_packed.1} parent=1 // pred_check_branch
      %32 = sbr.rel (0) target = $region17
    $region16: #{_dqn_forward_dual_packed.1} parent=1 // pred_region
      _
    $region17: #{_dqn_forward_dual_packed.1} parent=1 // pred_fallthru
      _
    // Predicated region
    $region18: #{_dqn_forward_dual_packed.1} parent=1 // pred_check
      _
    $region19: #{_dqn_forward_dual_packed.1} parent=1 // pred_check_branch
      %34 = sbr.rel (0) target = $region21
    $region20: #{_dqn_forward_dual_packed.1} parent=1 // pred_region
      _
    $region21: #{_dqn_forward_dual_packed.1} parent=1 // pred_fallthru
      _
    // Predicated region
    $region22: #{_dqn_forward_dual_packed.1} parent=1 // pred_check
      _
    $region23: #{_dqn_forward_dual_packed.1} parent=1 // pred_check_branch
      %36 = sbr.rel (0) target = $region25
    $region24: #{_dqn_forward_dual_packed.1} parent=1 // pred_region
      _
    $region25: #{_dqn_forward_dual_packed.1} parent=1 // pred_fallthru
      _
    // Predicated region
    $region26: #{_dqn_forward_dual_packed.1} parent=1 // pred_check
      _
    $region27: #{_dqn_forward_dual_packed.1} parent=1 // pred_check_branch
      %38 = sbr.rel (0) target = $region29
    $region28: #{_dqn_forward_dual_packed.1} parent=1 // pred_region
      _
    $region29: #{_dqn_forward_dual_packed.1} parent=1 // pred_fallthru
      _
    // Predicated region
    $region30: #{_dqn_forward_dual_packed.1} parent=1 // pred_check
      _
    $region31: #{_dqn_forward_dual_packed.1} parent=1 // pred_check_branch
      %40 = sbr.rel (0) target = $region33
    $region32: #{_dqn_forward_dual_packed.1} parent=1 // pred_region
      %41 = dma.done [#allocation3], 128
    $region33: #{_dqn_forward_dual_packed.1} parent=1 // pred_fallthru
      _
    %v42 = vld [vmem:[#allocation2] sm:$0xff]
    %v43 = vld [vmem:[%s1] sm:$0xff]
    %v44 = vld [vmem:[%s1 + $0x8] sm:$0xff]
    %v45 = vld [vmem:[%s2] sm:$0x1]
    %v47 = vlaneseq
    %v48 = vshrl.u32 %v47, 7
    %v49 = vsub.s32 0, %v48
    %v50 = vrot.slane %v45, %v49
    %vm52 = vcmask 130048
    %v54 = vsel %vm52, %v42, 0
    %56 = vmatprep.subr.mxu0 0.0
    %57 = vmatpush1.msra.mxu0 %v43
    %58 = vmatprep.subr.mxu0 0.0
    %59 = vmatpush1.msra.mxu0 %v44
    %60 = vmatprep.subr.mxu0 0.0
    %61 = vmatpush1.msra.mxu0 0.0
    %62 = vmatprep.subr.mxu0 0.0
    %63 = vmatpush1.msra.mxu0 0.0
    %64 = vmatprep.subr.mxu0 0.0
    %65 = vmatpush1.msra.mxu0 0.0
    %66 = vmatprep.subr.mxu0 0.0
    %67 = vmatpush1.msra.mxu0 0.0
    %68 = vmatprep.subr.mxu0 0.0
    %69 = vmatpush1.msra.mxu0 0.0
    %70 = vmatprep.subr.mxu0 0.0
    %71 = vmatpush1.msra.mxu0 0.0
    %72 = vmatprep.subr.mxu0 0.0
    %73 = vmatpush1.msra.mxu0 0.0
    %74 = vmatprep.subr.mxu0 0.0
    %75 = vmatpush1.msra.mxu0 0.0
    %76 = vmatprep.subr.mxu0 0.0
    %77 = vmatpush1.msra.mxu0 0.0
    %78 = vmatprep.subr.mxu0 0.0
    %79 = vmatpush1.msra.mxu0 0.0
    %80 = vmatprep.subr.mxu0 0.0
    %81 = vmatpush1.msra.mxu0 0.0
    %82 = vmatprep.subr.mxu0 0.0
    %83 = vmatpush1.msra.mxu0 0.0
    %84 = vmatprep.subr.mxu0 0.0
    %85 = vmatpush1.msra.mxu0 0.0
    %86 = vmatprep.subr.mxu0 0.0
    %87 = vmatpush1.msra.mxu0 0.0
    %88 = vmatprep.subr.mxu0 0.0
    %89 = vmatpush1.msra.mxu0 0.0
    %90 = vmatprep.subr.mxu0 0.0
    %91 = vmatpush1.msra.mxu0 0.0
    %92 = vmatprep.subr.mxu0 0.0
    %93 = vmatpush1.msra.mxu0 0.0
    %94 = vmatprep.subr.mxu0 0.0
    %95 = vmatpush1.msra.mxu0 0.0
    %96 = vmatprep.subr.mxu0 0.0
    %97 = vmatpush1.msra.mxu0 0.0
    %98 = vmatprep.subr.mxu0 0.0
    %99 = vmatpush1.msra.mxu0 0.0
    %100 = vmatprep.subr.mxu0 0.0
    %101 = vmatpush1.msra.mxu0 0.0
    %102 = vmatprep.subr.mxu0 0.0
    %103 = vmatpush1.msra.mxu0 0.0
    %104 = vmatprep.subr.mxu0 0.0
    %105 = vmatpush1.msra.mxu0 0.0
    %106 = vmatprep.subr.mxu0 0.0
    %107 = vmatpush1.msra.mxu0 0.0
    %108 = vmatprep.subr.mxu0 0.0
    %109 = vmatpush1.msra.mxu0 0.0
    %110 = vmatprep.subr.mxu0 0.0
    %111 = vmatpush1.msra.mxu0 0.0
    %112 = vmatprep.subr.mxu0 0.0
    %113 = vmatpush1.msra.mxu0 0.0
    %114 = vmatprep.subr.mxu0 0.0
    %115 = vmatpush1.msra.mxu0 0.0
    %116 = vmatprep.subr.mxu0 0.0
    %117 = vmatpush1.msra.mxu0 0.0
    %118 = vmatprep.subr.mxu0 0.0
    %119 = vmatpush1.msra.mxu0 0.0
    %120 = vmatprep.mubr.f32.mxu0 0.0
    %121 = vmatmul.mubr.f32.gmra.mrb[0].mxu0 %v54
    %v122 = vpop.f32.mrb[0].mxu0
    %v123 = vadd.f32 %v50, %v122
    %v124 = vpop.f32.mrb[0].mxu0
    %125 = vdwg.mxu0
    %v126 = vmax.f32 %v123, 0.0
    %v127 = vld [vmem:[%s3] sm:$0xff]
    %v128 = vld [vmem:[%s3 + $0x8] sm:$0xff]
    %v129 = vld [vmem:[%s3 + $0x10] sm:$0xff]
    %v130 = vld [vmem:[%s3 + $0x18] sm:$0xff]
    %v131 = vld [vmem:[%s3 + $0x20] sm:$0xff]
    %v132 = vld [vmem:[%s3 + $0x28] sm:$0xff]
    %v133 = vld [vmem:[%s3 + $0x30] sm:$0xff]
    %v134 = vld [vmem:[%s3 + $0x38] sm:$0xff]
    %v135 = vld [vmem:[%s4] sm:$0x1]
    %v137 = vlaneseq
    %v138 = vshrl.u32 %v137, 7
    %v139 = vsub.s32 0, %v138
    %v140 = vrot.slane %v135, %v139
    %vm142 = vcmask 523264
    %v144 = vsel %vm142, %v126, 0
    %146 = vmatprep.subr.mxu0 0.0
    %147 = vmatpush1.msra.mxu0 %v127
    %148 = vmatprep.subr.mxu0 0.0
    %149 = vmatpush1.msra.mxu0 %v128
    %150 = vmatprep.subr.mxu0 0.0
    %151 = vmatpush1.msra.mxu0 %v129
    %152 = vmatprep.subr.mxu0 0.0
    %153 = vmatpush1.msra.mxu0 %v130
    %154 = vmatprep.subr.mxu0 0.0
    %155 = vmatpush1.msra.mxu0 %v131
    %156 = vmatprep.subr.mxu0 0.0
    %157 = vmatpush1.msra.mxu0 %v132
    %158 = vmatprep.subr.mxu0 0.0
    %159 = vmatpush1.msra.mxu0 %v133
    %160 = vmatprep.subr.mxu0 0.0
    %161 = vmatpush1.msra.mxu0 %v134
    %162 = vmatprep.subr.mxu0 0.0
    %163 = vmatpush1.msra.mxu0 0.0
    %164 = vmatprep.subr.mxu0 0.0
    %165 = vmatpush1.msra.mxu0 0.0
    %166 = vmatprep.subr.mxu0 0.0
    %167 = vmatpush1.msra.mxu0 0.0
    %168 = vmatprep.subr.mxu0 0.0
    %169 = vmatpush1.msra.mxu0 0.0
    %170 = vmatprep.subr.mxu0 0.0
    %171 = vmatpush1.msra.mxu0 0.0
    %172 = vmatprep.subr.mxu0 0.0
    %173 = vmatpush1.msra.mxu0 0.0
    %174 = vmatprep.subr.mxu0 0.0
    %175 = vmatpush1.msra.mxu0 0.0
    %176 = vmatprep.subr.mxu0 0.0
    %177 = vmatpush1.msra.mxu0 0.0
    %178 = vmatprep.subr.mxu0 0.0
    %179 = vmatpush1.msra.mxu0 0.0
    %180 = vmatprep.subr.mxu0 0.0
    %181 = vmatpush1.msra.mxu0 0.0
    %182 = vmatprep.subr.mxu0 0.0
    %183 = vmatpush1.msra.mxu0 0.0
    %184 = vmatprep.subr.mxu0 0.0
    %185 = vmatpush1.msra.mxu0 0.0
    %186 = vmatprep.subr.mxu0 0.0
    %187 = vmatpush1.msra.mxu0 0.0
    %188 = vmatprep.subr.mxu0 0.0
    %189 = vmatpush1.msra.mxu0 0.0
    %190 = vmatprep.subr.mxu0 0.0
    %191 = vmatpush1.msra.mxu0 0.0
    %192 = vmatprep.subr.mxu0 0.0
    %193 = vmatpush1.msra.mxu0 0.0
    %194 = vmatprep.subr.mxu0 0.0
    %195 = vmatpush1.msra.mxu0 0.0
    %196 = vmatprep.subr.mxu0 0.0
    %197 = vmatpush1.msra.mxu0 0.0
    %198 = vmatprep.subr.mxu0 0.0
    %199 = vmatpush1.msra.mxu0 0.0
    %200 = vmatprep.subr.mxu0 0.0
    %201 = vmatpush1.msra.mxu0 0.0
    %202 = vmatprep.subr.mxu0 0.0
    %203 = vmatpush1.msra.mxu0 0.0
    %204 = vmatprep.subr.mxu0 0.0
    %205 = vmatpush1.msra.mxu0 0.0
    %206 = vmatprep.subr.mxu0 0.0
    %207 = vmatpush1.msra.mxu0 0.0
    %208 = vmatprep.subr.mxu0 0.0
    %209 = vmatpush1.msra.mxu0 0.0
    %210 = vmatprep.mubr.f32.mxu0 0.0
    %211 = vmatmul.mubr.f32.gmra.mrb[0].mxu0 %v144
    %v212 = vpop.f32.mrb[0].mxu0
    %v213 = vadd.f32 %v140, %v212
    %v214 = vpop.f32.mrb[0].mxu0
    %215 = vdwg.mxu0
    %v216 = vmax.f32 %v213, 0.0
    %v217 = vld [vmem:[%s5] sm:$0xff]
    %v218 = vld [vmem:[%s5 + $0x8] sm:$0xff]
    %v219 = vld [vmem:[%s5 + $0x10] sm:$0xff]
    %v220 = vld [vmem:[%s5 + $0x18] sm:$0xff]
    %v221 = vld [vmem:[%s5 + $0x20] sm:$0xff]
    %v222 = vld [vmem:[%s5 + $0x28] sm:$0xff]
    %v223 = vld [vmem:[%s5 + $0x30] sm:$0xff]
    %v224 = vld [vmem:[%s5 + $0x38] sm:$0xff]
    %v225 = vld [vmem:[%s6] sm:$0x1]
    %v227 = vlaneseq
    %v228 = vshrl.u32 %v227, 7
    %v229 = vsub.s32 0, %v228
    %v230 = vrot.slane %v225, %v229
    %v233 = vsel %vm142, %v216, 0
    %235 = vmatprep.subr.mxu0 0.0
    %236 = vmatpush1.msra.mxu0 %v217
    %237 = vmatprep.subr.mxu0 0.0
    %238 = vmatpush1.msra.mxu0 %v218
    %239 = vmatprep.subr.mxu0 0.0
    %240 = vmatpush1.msra.mxu0 %v219
    %241 = vmatprep.subr.mxu0 0.0
    %242 = vmatpush1.msra.mxu0 %v220
    %243 = vmatprep.subr.mxu0 0.0
    %244 = vmatpush1.msra.mxu0 %v221
    %245 = vmatprep.subr.mxu0 0.0
    %246 = vmatpush1.msra.mxu0 %v222
    %247 = vmatprep.subr.mxu0 0.0
    %248 = vmatpush1.msra.mxu0 %v223
    %249 = vmatprep.subr.mxu0 0.0
    %250 = vmatpush1.msra.mxu0 %v224
    %251 = vmatprep.subr.mxu0 0.0
    %252 = vmatpush1.msra.mxu0 0.0
    %253 = vmatprep.subr.mxu0 0.0
    %254 = vmatpush1.msra.mxu0 0.0
    %255 = vmatprep.subr.mxu0 0.0
    %256 = vmatpush1.msra.mxu0 0.0
    %257 = vmatprep.subr.mxu0 0.0
    %258 = vmatpush1.msra.mxu0 0.0
    %259 = vmatprep.subr.mxu0 0.0
    %260 = vmatpush1.msra.mxu0 0.0
    %261 = vmatprep.subr.mxu0 0.0
    %262 = vmatpush1.msra.mxu0 0.0
    %263 = vmatprep.subr.mxu0 0.0
    %264 = vmatpush1.msra.mxu0 0.0
    %265 = vmatprep.subr.mxu0 0.0
    %266 = vmatpush1.msra.mxu0 0.0
    %267 = vmatprep.subr.mxu0 0.0
    %268 = vmatpush1.msra.mxu0 0.0
    %269 = vmatprep.subr.mxu0 0.0
    %270 = vmatpush1.msra.mxu0 0.0
    %271 = vmatprep.subr.mxu0 0.0
    %272 = vmatpush1.msra.mxu0 0.0
    %273 = vmatprep.subr.mxu0 0.0
    %274 = vmatpush1.msra.mxu0 0.0
    %275 = vmatprep.subr.mxu0 0.0
    %276 = vmatpush1.msra.mxu0 0.0
    %277 = vmatprep.subr.mxu0 0.0
    %278 = vmatpush1.msra.mxu0 0.0
    %279 = vmatprep.subr.mxu0 0.0
    %280 = vmatpush1.msra.mxu0 0.0
    %281 = vmatprep.subr.mxu0 0.0
    %282 = vmatpush1.msra.mxu0 0.0
    %283 = vmatprep.subr.mxu0 0.0
    %284 = vmatpush1.msra.mxu0 0.0
    %285 = vmatprep.subr.mxu0 0.0
    %286 = vmatpush1.msra.mxu0 0.0
    %287 = vmatprep.subr.mxu0 0.0
    %288 = vmatpush1.msra.mxu0 0.0
    %289 = vmatprep.subr.mxu0 0.0
    %290 = vmatpush1.msra.mxu0 0.0
    %291 = vmatprep.subr.mxu0 0.0
    %292 = vmatpush1.msra.mxu0 0.0
    %293 = vmatprep.subr.mxu0 0.0
    %294 = vmatpush1.msra.mxu0 0.0
    %295 = vmatprep.subr.mxu0 0.0
    %296 = vmatpush1.msra.mxu0 0.0
    %297 = vmatprep.subr.mxu0 0.0
    %298 = vmatpush1.msra.mxu0 0.0
    %299 = vmatprep.mubr.f32.mxu0 0.0
    %300 = vmatmul.mubr.f32.gmra.mrb[0].mxu0 %v233
    %v301 = vpop.f32.mrb[0].mxu0
    %v302 = vadd.f32 %v230, %v301
    %v303 = vpop.f32.mrb[0].mxu0
    %304 = vdwg.mxu0
    %v305 = vmax.f32 %v302, 0.0
    %vm306 = vcmask 64512
    %v307 = vsel %vm306, %v305, -inf
    %308 = vmax.xlane.f32.xlu0 %v307
    %v309 = vpop.xlane.xlu0 %308
    %v310 = vsub.f32 %v305, %v309
    %v311 = vmul.f32 %v310, 1.442695
    %v312 = vpow.pop %v311
    %v313 = vsel %vm306, %v312, 0.0
    %314 = vadd.xlane.f32.xlu0 %v313
    %v315 = vpop.xlane.xlu0 %314
    %v316 = vrcp.pop %v315
    %v317 = vmul.f32 %v312, %v316
    %318 = vst.msk [vmem:[#allocation5] sm:$0xff] %vm306, %v317
    %vm319 = vcmask 130112
    %v320 = vsel %vm319, %v305, -inf
    %321 = vmax.xlane.f32.xlu0 %v320
    %v322 = vpop.xlane.xlu0 %321
    %v323 = vsub.f32 %v305, %v322
    %v324 = vmul.f32 %v323, 1.442695
    %v325 = vpow.pop %v324
    %327 = vrot.lane.b32.xlu0 %v325, 120
    %v328 = vpop.permute.xlu0 %327
    %v330 = vsel %vm306, %v328, 0.0
    %331 = vadd.xlane.f32.xlu0 %v330
    %v332 = vpop.xlane.xlu0 %331
    %v333 = vrcp.pop %v332
    %v334 = vmul.f32 %v325, %v333
    %336 = vrot.lane.b32.xlu0 %v334, 120
    %v337 = vpop.permute.xlu0 %336
    %339 = vst.msk [vmem:[#allocation6] sm:$0xff] %vm306, %v337
    // Predicated region
    $region34: #{_dqn_forward_dual_packed.1} parent=1 // pred_check
      _
    $region35: #{_dqn_forward_dual_packed.1} parent=1 // pred_check_branch
      %341 = sbr.rel (0) target = $region37
    $region36: #{_dqn_forward_dual_packed.1} parent=1 // pred_region
      %s343 = ssub.s32 128, 128
      %344 = vsyncadd [#allocation4], %s343
      %s346 = sshll.u32 [#allocation5], 4
      %s347 = int_to_ptr.vmem [resolvable:$true] %s346
      %349 = dma.vmem_to_hbm [thread:$0]  %s347, 128, %s7, [#allocation4]
    $region37: #{_dqn_forward_dual_packed.1} parent=1 // pred_fallthru
      _
    // Predicated region
    $region38: #{_dqn_forward_dual_packed.1} parent=1 // pred_check
      _
    $region39: #{_dqn_forward_dual_packed.1} parent=1 // pred_check_branch
      %351 = sbr.rel (0) target = $region41
    $region40: #{_dqn_forward_dual_packed.1} parent=1 // pred_region
      %s353 = ssub.s32 128, 128
      %354 = vsyncadd [#allocation7], %s353
      %s356 = sshll.u32 [#allocation6], 4
      %s357 = int_to_ptr.vmem [resolvable:$true] %s356
      %359 = dma.vmem_to_hbm [thread:$0]  %s357, 128, %s8, [#allocation7]
    $region41: #{_dqn_forward_dual_packed.1} parent=1 // pred_fallthru
      _
    // Predicated region
    $region42: #{_dqn_forward_dual_packed.1} parent=1 // pred_check
      _
    $region43: #{_dqn_forward_dual_packed.1} parent=1 // pred_check_branch
      %361 = sbr.rel (0) target = $region45
    $region44: #{_dqn_forward_dual_packed.1} parent=1 // pred_region
      %362 = dma.done [#allocation4], 128
    $region45: #{_dqn_forward_dual_packed.1} parent=1 // pred_fallthru
      _
    // Predicated region
    $region46: #{_dqn_forward_dual_packed.1} parent=1 // pred_check
      _
    $region47: #{_dqn_forward_dual_packed.1} parent=1 // pred_check_branch
      %364 = sbr.rel (0) target = $region49
    $region48: #{_dqn_forward_dual_packed.1} parent=1 // pred_region
      %365 = dma.done [#allocation7], 128
    $region49: #{_dqn_forward_dual_packed.1} parent=1 // pred_fallthru
      _
    %366 = vsyncpa [#allocation3], 1
    %367 = vsyncpa [#allocation4], 1
    %368 = vsyncpa [#allocation7], 1

</llo_original>
